<compile_context>
chip_gen: v7x
topology: tpu7x:2x2x1
jax: 0.10.0
libtpu: 0.0.40
codegen_flags: <defaults>
</compile_context>

<pallas_src>
import functools
import math

import jax
import jax.numpy as jnp
from jax.experimental import pallas as pl
from jax.experimental.pallas import tpu as pltpu


def _vmem_capacity_bytes():
    """Per-core VMEM capacity; conservative (v7x) default if the query fails."""
    try:
        info = pltpu.get_tpu_info()
        cap = getattr(info, "vmem_capacity_bytes", None)
        if cap:
            return int(cap)
    except Exception:
        pass
    return 64 << 20


# ----------------------------------------------------------------------------
# Fused kernel: GAP + MLP + softmax + weighted sum for one batch block.
# refs = (x_0..x_{height-1}, w1t, w2, out)
#   x_k : (Bt, C, HW)        branch-k features (input dtype)
#   w1t : (C, d)             first 1x1 conv weight, transposed (f32)
#   w2  : (height, C, d)     second 1x1 conv weight, per branch (f32)
#   out : (Bt, C, HW)
# ----------------------------------------------------------------------------
def _sk_fused_kernel(*refs, height, inv_hw):
    x_refs = refs[:height]
    w1t_ref = refs[height]
    w2_ref = refs[height + 1]
    o_ref = refs[height + 2]

    # Global-average-pool of feats_sum without materializing feats_sum:
    # per-branch lane sums (XLU slot) accumulated in f32.
    pooled = None
    for k in range(height):
        xk = x_refs[k][...].astype(jnp.float32)
        s = jnp.sum(xk, axis=-1, keepdims=True)                    # (Bt, C, 1)
        pooled = s if pooled is None else pooled + s
    pooled = pooled * inv_hw

    # hidden = relu(W1 @ pooled)  as broadcast-mul + sublane reduction
    w1t = w1t_ref[...]                                             # (C, d)
    hidden = jnp.sum(w1t[None, :, :] * pooled, axis=1, keepdims=True)  # (Bt, 1, d)
    hidden = jnp.maximum(hidden, 0.0)

    # logits_k[b, c] = sum_j W2[k, c, j] * hidden[b, j]
    logits = []
    for k in range(height):
        w2k = w2_ref[k]                                            # (C, d)
        logits.append(jnp.sum(w2k[None, :, :] * hidden, axis=-1, keepdims=True))

    # numerically stable softmax over the `height` branches, per channel
    m = logits[0]
    for k in range(1, height):
        m = jnp.maximum(m, logits[k])
    es = [jnp.exp(l - m) for l in logits]
    den = es[0]
    for k in range(1, height):
        den = den + es[k]
    inv_den = pl.reciprocal(den, approx=True)                      # EUP slot, ~free

    # out = sum_k x_k * attn_k  (attn broadcast over the lane / HW axis)
    out = None
    for k in range(height):
        a = es[k] * inv_den                                        # (Bt, C, 1)
        term = x_refs[k][...].astype(jnp.float32) * a
        out = term if out is None else out + term
    o_ref[...] = out.astype(o_ref.dtype)


# ----------------------------------------------------------------------------
# Fallback "apply" kernel (attention precomputed): spatially tiled weighted sum.
# refs = (x_0..x_{height-1}, attn, out)
#   x_k  : (1, C, Thw)
#   attn : (1, C, height)  f32
#   out  : (1, C, Thw)
# ----------------------------------------------------------------------------
def _sk_apply_kernel(*refs, height):
    x_refs = refs[:height]
    attn_ref = refs[height]
    o_ref = refs[height + 1]

    attn = attn_ref[...]                                           # (1, C, height)
    out = None
    for k in range(height):
        a = attn[:, :, k:k + 1]                                    # (1, C, 1)
        term = x_refs[k][...].astype(jnp.float32) * a
        out = term if out is None else out + term
    o_ref[...] = out.astype(o_ref.dtype)


# ----------------------------------------------------------------------------
# Module wrapper
# ----------------------------------------------------------------------------
class SKFusionPallas:
    """Pallas TPU implementation of SKFusion.forward."""

    def __init__(self, dim, height=2, reduction=8, key=None):
        if key is None:
            key = jax.random.PRNGKey(0)
        self.dim = dim
        self.height = height
        self.d = max(int(dim / reduction), 4)

        # PyTorch Conv2d(bias=False) default init ~ U(-1/sqrt(fan_in), 1/sqrt(fan_in))
        k1, k2 = jax.random.split(key)
        b1 = 1.0 / math.sqrt(dim)
        b2 = 1.0 / math.sqrt(self.d)
        self.w1 = jax.random.uniform(k1, (self.d, dim), jnp.float32, -b1, b1)           # Conv2d(dim, d, 1)
        self.w2 = jax.random.uniform(k2, (dim * height, self.d), jnp.float32, -b2, b2)  # Conv2d(d, dim*height, 1)

    # ---------------- main entry ----------------
    def __call__(self, in_feats, force_two_pass=False):
        assert len(in_feats) == self.height
        B, C, H, W = in_feats[0].shape
        assert C == self.dim
        HW = H * W
        dtype = in_feats[0].dtype
        isz = jnp.dtype(dtype).itemsize

        # No host-side pad / astype / output slice: reshape is free, and block
        # last-two dims equal the full array dims so no (8,128) padding needed.
        xs = [x.reshape(B, C, HW) for x in in_feats]
        w1t = self.w1.T                                    # (C, d)
        w2r = self.w2.reshape(self.height, C, self.d)      # (height, C, d)

        budget = max(_vmem_capacity_bytes() - (16 << 20), 16 << 20)
        w_bytes = 2 * (self.height + 1) * C * self.d * 4   # (double-buffered) weight blocks

        def fused_need(bt):
            blk = bt * C * HW * isz
            # double-buffered I/O blocks + in-kernel f32 temporaries + slack
            return 2 * (self.height + 1) * blk + 2 * bt * C * HW * 4 + w_bytes + (1 << 20)

        # Batch packing: small maps -> several batch elements per step (~2 MiB/step);
        # large maps -> Bt=1 so the "parallel" batch grid shards across cores.
        per_b = C * HW * isz
        if per_b >= (1 << 20):
            bt = 1
        else:
            bt = min(B, max(1, (2 << 20) // max(per_b, 1)))
        while bt > 1 and (B % bt != 0 or fused_need(bt) > budget):
            bt -= 1

        if (not force_two_pass) and fused_need(bt) <= budget:
            out = self._fused_call(xs, w1t, w2r, B, C, HW, bt, dtype, budget)
        else:
            out = self._two_pass_call(xs, w1t, w2r, B, C, HW, dtype, isz, budget)
        return out.reshape(B, C, H, W)

    # ---------------- single fused pass ----------------
    def _fused_call(self, xs, w1t, w2r, B, C, HW, bt, dtype, budget):
        kernel = functools.partial(_sk_fused_kernel,
                                   height=self.height, inv_hw=1.0 / float(HW))
        x_spec = pl.BlockSpec((bt, C, HW), lambda b: (b, 0, 0))
        # Weight BlockSpecs have constant index maps, so Pallas keeps the blocks
        # resident across batch steps (no per-step re-DMA).
        return pl.pallas_call(
            kernel,
            out_shape=jax.ShapeDtypeStruct((B, C, HW), dtype),
            grid=(B // bt,),
            in_specs=[x_spec] * self.height + [
                pl.BlockSpec((C, self.d), lambda b: (0, 0)),
                pl.BlockSpec((self.height, C, self.d), lambda b: (0, 0, 0)),
            ],
            out_specs=pl.BlockSpec((bt, C, HW), lambda b: (b, 0, 0)),
            compiler_params=pltpu.CompilerParams(
                dimension_semantics=("parallel",),
                vmem_limit_bytes=int(min(budget, 112 << 20))),
        )(*xs, w1t, w2r)

    # ---------------- two-pass fallback (maps too large for a full VMEM block) ----
    def _two_pass_call(self, xs, w1t, w2r, B, C, HW, dtype, isz, budget):
        height, d = self.height, self.d

        # Pass 1: GAP + tiny MLP + softmax.  The GAP is a plain bandwidth-bound
        # mean that XLA already runs near the HBM roofline, and the MLP/softmax
        # result is microscopic ((B, C, height)), so keep this pass in JAX.
        pooled = None
        for x in xs:
            p = jnp.mean(x, axis=-1, dtype=jnp.float32)            # (B, C)
            pooled = p if pooled is None else pooled + p
        hidden = jnp.maximum(pooled @ w1t, 0.0)                    # (B, d)
        logits = jnp.einsum('bd,kcd->bck', hidden, w2r)            # (B, C, height)
        attn = jax.nn.softmax(logits, axis=-1).astype(jnp.float32)

        # Pass 2: spatially tiled weighted-sum apply kernel.
        per_col = 2 * (height + 1) * C * isz + 2 * C * 4           # bytes per HW column
        fixed = 2 * C * height * 4 + (1 << 20)
        thw = max(128, ((budget - fixed) // max(per_col, 1)) // 128 * 128)
        if thw >= HW:
            thw = HW                                               # full dim always legal
        # TODO(synk): if even a (1, C, 128) block exceeded VMEM (enormous C), tile C too.
        n_hw = pl.cdiv(HW, thw)

        kernel = functools.partial(_sk_apply_kernel, height=height)
        x_spec = pl.BlockSpec((1, C, thw), lambda b, h: (b, 0, h))
        return pl.pallas_call(
            kernel,
            out_shape=jax.ShapeDtypeStruct((B, C, HW), dtype),
            grid=(B, n_hw),
            in_specs=[x_spec] * height + [
                pl.BlockSpec((1, C, height), lambda b, h: (b, 0, 0)),
            ],
            out_specs=pl.BlockSpec((1, C, thw), lambda b, h: (b, 0, h)),
            compiler_params=pltpu.CompilerParams(
                dimension_semantics=("parallel", "parallel"),
                vmem_limit_bytes=int(min(budget, 112 << 20))),
        )(*xs, attn)


# ----------------------------------------------------------------------------
# Pure-JAX reference (mirrors the PyTorch forward) for a correctness check.
# ----------------------------------------------------------------------------
def _reference(in_feats, w1, w2, height):
    B, C, H, W = in_feats[0].shape
    stacked = jnp.stack([x.astype(jnp.float32) for x in in_feats], axis=1)  # (B,h,C,H,W)
    feats_sum = jnp.sum(stacked, axis=1)
    pooled = jnp.mean(feats_sum, axis=(2, 3))                               # (B, C)
    hidden = jnp.maximum(pooled @ w1.T, 0.0)                                # (B, d)
    attn = hidden @ w2.T                                                    # (B, h*C)
    attn = jax.nn.softmax(attn.reshape(B, height, C), axis=1)
    return jnp.sum(stacked * attn[:, :, :, None, None], axis=1)


if __name__ == "__main__":
    key = jax.random.PRNGKey(0)
    k0, k1, kp = jax.random.split(key, 3)

    # small shapes: batch=2, dim=32 channels, 16x16 spatial, height=2 branches
    B, C, H, W = 2, 32, 16, 16
    x0 = jax.random.normal(k0, (B, C, H, W), jnp.float32)
    x1 = jax.random.normal(k1, (B, C, H, W), jnp.float32)

    fusion = SKFusionPallas(dim=C, height=2, reduction=8, key=kp)
    ref = _reference([x0, x1], fusion.w1, fusion.w2, fusion.height)

    # Main fused single-pass path.
    out = jax.block_until_ready(fusion([x0, x1]))
    assert out.shape == (B, C, H, W), out.shape
    assert bool(jnp.all(jnp.isfinite(out)))
    assert bool(jnp.allclose(out, ref, atol=2e-3, rtol=2e-3)), \
        float(jnp.max(jnp.abs(out - ref)))

    # Two-pass fallback path (exercised here with a forced flag so it is tested
    # at small shapes; normally used when feature maps exceed the VMEM budget).
    out2 = jax.block_until_ready(fusion([x0, x1], force_two_pass=True))
    assert out2.shape == (B, C, H, W), out2.shape
    assert bool(jnp.allclose(out2, ref, atol=2e-3, rtol=2e-3)), \
        float(jnp.max(jnp.abs(out2 - ref)))

    print("KERNEL_OK")
</pallas_src>

<mosaic_0001>
module attributes {stable_mosaic.version = 11 : i64} {
  func.func @_sk_fused_kernel(%arg0: i32, %arg1: memref<2x32x256xf32, #tpu.memory_space<vmem>>, %arg2: memref<2x32x256xf32, #tpu.memory_space<vmem>>, %arg3: memref<32x4xf32, #tpu.memory_space<vmem>>, %arg4: memref<2x32x4xf32, #tpu.memory_space<vmem>>, %arg5: memref<2x32x256xf32, #tpu.memory_space<vmem>>) attributes {dimension_semantics = [#tpu.dimension_semantics<parallel>], iteration_bounds = array<i64: 1>, scalar_prefetch = 0 : i64, scratch_operands = 0 : i64, tpu.core_type = #tpu.core_type<tc>, window_params = [{transform_indices = @transform_0, window_bounds = array<i64: 2, 32, 256>}, {transform_indices = @transform_1, window_bounds = array<i64: 2, 32, 256>}, {pipeline_mode = #tpu.pipeline_mode<synchronous>, transform_indices = @transform_2, window_bounds = array<i64: 32, 4>}, {pipeline_mode = #tpu.pipeline_mode<synchronous>, transform_indices = @transform_3, window_bounds = array<i64: 2, 32, 4>}, {transform_indices = @transform_4, window_bounds = array<i64: 2, 32, 256>}]} {
    %c0 = arith.constant 0 : index
    %c0_0 = arith.constant 0 : index
    %c0_1 = arith.constant 0 : index
    %0 = vector.load %arg1[%c0, %c0_0, %c0_1] : memref<2x32x256xf32, #tpu.memory_space<vmem>>, vector<2x32x256xf32>
    %cst = arith.constant dense<0.000000e+00> : vector<2x32xf32>
    %1 = vector.multi_reduction <add>, %0, %cst [2] : vector<2x32x256xf32> to vector<2x32xf32>
    %2 = vector.shape_cast %1 : vector<2x32xf32> to vector<2x32x1xf32>
    %c0_2 = arith.constant 0 : index
    %c0_3 = arith.constant 0 : index
    %c0_4 = arith.constant 0 : index
    %3 = vector.load %arg2[%c0_2, %c0_3, %c0_4] : memref<2x32x256xf32, #tpu.memory_space<vmem>>, vector<2x32x256xf32>
    %cst_5 = arith.constant dense<0.000000e+00> : vector<2x32xf32>
    %4 = vector.multi_reduction <add>, %3, %cst_5 [2] : vector<2x32x256xf32> to vector<2x32xf32>
    %5 = vector.shape_cast %4 : vector<2x32xf32> to vector<2x32x1xf32>
    %6 = arith.addf %2, %5 : vector<2x32x1xf32>
    %cst_6 = arith.constant 3.906250e-03 : f32
    %7 = vector.broadcast %cst_6 : f32 to vector<2x32x1xf32>
    %8 = arith.mulf %6, %7 : vector<2x32x1xf32>
    %c0_7 = arith.constant 0 : index
    %c0_8 = arith.constant 0 : index
    %9 = vector.load %arg3[%c0_7, %c0_8] : memref<32x4xf32, #tpu.memory_space<vmem>>, vector<32x4xf32>
    %10 = vector.shape_cast %9 : vector<32x4xf32> to vector<1x32x4xf32>
    %11 = vector.broadcast %10 : vector<1x32x4xf32> to vector<2x32x4xf32>
    %12 = vector.broadcast %8 : vector<2x32x1xf32> to vector<2x32x4xf32>
    %13 = arith.mulf %11, %12 : vector<2x32x4xf32>
    %cst_9 = arith.constant dense<0.000000e+00> : vector<2x4xf32>
    %14 = vector.multi_reduction <add>, %13, %cst_9 [1] : vector<2x32x4xf32> to vector<2x4xf32>
    %15 = vector.shape_cast %14 : vector<2x4xf32> to vector<2x1x4xf32>
    %cst_10 = arith.constant 0.000000e+00 : f32
    %16 = vector.broadcast %cst_10 : f32 to vector<2x1x4xf32>
    %17 = arith.maximumf %15, %16 : vector<2x1x4xf32>
    %c0_11 = arith.constant 0 : index
    %c0_12 = arith.constant 0 : index
    %c0_13 = arith.constant 0 : index
    %18 = vector.load %arg4[%c0_11, %c0_12, %c0_13] : memref<2x32x4xf32, #tpu.memory_space<vmem>>, vector<1x32x4xf32>
    %19 = vector.shape_cast %18 : vector<1x32x4xf32> to vector<32x4xf32>
    %20 = vector.shape_cast %19 : vector<32x4xf32> to vector<1x32x4xf32>
    %21 = vector.broadcast %20 : vector<1x32x4xf32> to vector<2x32x4xf32>
    %22 = vector.broadcast %17 : vector<2x1x4xf32> to vector<2x32x4xf32>
    %23 = arith.mulf %21, %22 : vector<2x32x4xf32>
    %cst_14 = arith.constant dense<0.000000e+00> : vector<2x32xf32>
    %24 = vector.multi_reduction <add>, %23, %cst_14 [2] : vector<2x32x4xf32> to vector<2x32xf32>
    %25 = vector.shape_cast %24 : vector<2x32xf32> to vector<2x32x1xf32>
    %c1 = arith.constant 1 : index
    %c0_15 = arith.constant 0 : index
    %c0_16 = arith.constant 0 : index
    %26 = vector.load %arg4[%c1, %c0_15, %c0_16] : memref<2x32x4xf32, #tpu.memory_space<vmem>>, vector<1x32x4xf32>
    %27 = vector.shape_cast %26 : vector<1x32x4xf32> to vector<32x4xf32>
    %28 = vector.shape_cast %27 : vector<32x4xf32> to vector<1x32x4xf32>
    %29 = vector.broadcast %28 : vector<1x32x4xf32> to vector<2x32x4xf32>
    %30 = vector.broadcast %17 : vector<2x1x4xf32> to vector<2x32x4xf32>
    %31 = arith.mulf %29, %30 : vector<2x32x4xf32>
    %cst_17 = arith.constant dense<0.000000e+00> : vector<2x32xf32>
    %32 = vector.multi_reduction <add>, %31, %cst_17 [2] : vector<2x32x4xf32> to vector<2x32xf32>
    %33 = vector.shape_cast %32 : vector<2x32xf32> to vector<2x32x1xf32>
    %34 = arith.maximumf %25, %33 : vector<2x32x1xf32>
    %35 = arith.subf %25, %34 : vector<2x32x1xf32>
    %36 = math.exp %35 : vector<2x32x1xf32>
    %37 = arith.subf %33, %34 : vector<2x32x1xf32>
    %38 = math.exp %37 : vector<2x32x1xf32>
    %39 = arith.addf %36, %38 : vector<2x32x1xf32>
    %40 = tpu.reciprocal %39 {approx = true} : vector<2x32x1xf32> -> vector<2x32x1xf32>
    %41 = arith.mulf %36, %40 : vector<2x32x1xf32>
    %c0_18 = arith.constant 0 : index
    %c0_19 = arith.constant 0 : index
    %c0_20 = arith.constant 0 : index
    %42 = vector.load %arg1[%c0_18, %c0_19, %c0_20] : memref<2x32x256xf32, #tpu.memory_space<vmem>>, vector<2x32x256xf32>
    %43 = vector.broadcast %41 : vector<2x32x1xf32> to vector<2x32x256xf32>
    %44 = arith.mulf %42, %43 : vector<2x32x256xf32>
    %45 = arith.mulf %38, %40 : vector<2x32x1xf32>
    %c0_21 = arith.constant 0 : index
    %c0_22 = arith.constant 0 : index
    %c0_23 = arith.constant 0 : index
    %46 = vector.load %arg2[%c0_21, %c0_22, %c0_23] : memref<2x32x256xf32, #tpu.memory_space<vmem>>, vector<2x32x256xf32>
    %47 = vector.broadcast %45 : vector<2x32x1xf32> to vector<2x32x256xf32>
    %48 = arith.mulf %46, %47 : vector<2x32x256xf32>
    %49 = arith.addf %44, %48 : vector<2x32x256xf32>
    %c0_24 = arith.constant 0 : index
    %c0_25 = arith.constant 0 : index
    %c0_26 = arith.constant 0 : index
    %50 = vector.load %arg5[%c0_24, %c0_25, %c0_26] : memref<2x32x256xf32, #tpu.memory_space<vmem>>, vector<2x32x256xf32>
    tpu.vector_store %arg5[%c0_24, %c0_25, %c0_26], %49 {strides = array<i32>} : memref<2x32x256xf32, #tpu.memory_space<vmem>>, vector<2x32x256xf32>,
    return
  }
  func.func @transform_0(%arg0: i32) -> (i32, i32, i32) {
    %c0_i32 = arith.constant 0 : i32
    %c0_i32_0 = arith.constant 0 : i32
    %c0_i32_1 = arith.constant 0 : i32
    return %arg0, %c0_i32, %c0_i32_0 : i32, i32, i32
  }
  func.func @transform_1(%arg0: i32) -> (i32, i32, i32) {
    %c0_i32 = arith.constant 0 : i32
    %c0_i32_0 = arith.constant 0 : i32
    %c0_i32_1 = arith.constant 0 : i32
    return %arg0, %c0_i32, %c0_i32_0 : i32, i32, i32
  }
  func.func @transform_2(%arg0: i32) -> (i32, i32) {
    %c0_i32 = arith.constant 0 : i32
    %c0_i32_0 = arith.constant 0 : i32
    %c0_i32_1 = arith.constant 0 : i32
    return %c0_i32, %c0_i32_0 : i32, i32
  }
  func.func @transform_3(%arg0: i32) -> (i32, i32, i32) {
    %c0_i32 = arith.constant 0 : i32
    %c0_i32_0 = arith.constant 0 : i32
    %c0_i32_1 = arith.constant 0 : i32
    %c0_i32_2 = arith.constant 0 : i32
    return %c0_i32, %c0_i32_0, %c0_i32_1 : i32, i32, i32
  }
  func.func @transform_4(%arg0: i32) -> (i32, i32, i32) {
    %c0_i32 = arith.constant 0 : i32
    %c0_i32_0 = arith.constant 0 : i32
    %c0_i32_1 = arith.constant 0 : i32
    return %arg0, %c0_i32, %c0_i32_0 : i32, i32, i32
  }
}

</mosaic_0001>

<llo_original>
// kernel: tpu_custom_call.1
$region0: #{tpu_custom_call.1}
  #allocation0 [shape = 'u32[]', space=smem, size = 0x4, offset = 0x4, fixed_abs, tag = 'smem constant byte address 0x4 - core index']
  #allocation1 [shape = 'u32[144,128]{1,0:T(1,128)}', space=vmem, size = 0x12000, scoped, tag = 'internal scratch']
  %s0 = inlined_call_operand.hbm [shape: f32[2,32,256], index: 0, kind: input, shape index: {}]
  %s1 = inlined_call_operand.hbm [shape: f32[2,32,256], index: 1, kind: input, shape index: {}]
  %s2 = inlined_call_operand.vmem [shape: f32[32,4], index: 2, kind: input, shape index: {}]
  %s3 = inlined_call_operand.vmem [shape: f32[2,32,4], index: 3, kind: input, shape index: {}]
  %s4 = inlined_call_operand.hbm [shape: f32[2,32,256], index: 4, kind: output, shape index: {}]
  %s5 = sld [smem:[#allocation0]]
  $region34: #{tpu_custom_call.1} parent=0
    _
  %s7 = ssub.s32 1, %s5
  %s8 = scalar_select 0, %s7, %s5
  $region1: #{tpu_custom_call.1} parent=0
    #allocation2 [shape = 'u8[65536]{0}', space=vmem, size = 0x10000, scoped, tag = 'input window, operand 0, single buffered']
    #allocation3 [shape = 's32[1]{0}', space=sflag, size = 0x4, scoped, tag = 'scoped memory for tpu_custom_call.1']
    #allocation4 [shape = 's32[1]{0}', space=sflag, size = 0x4, scoped, tag = 'scoped memory for tpu_custom_call.1']
    #allocation5 [shape = 'u8[65536]{0}', space=vmem, size = 0x10000, scoped, tag = 'input window, operand 1, single buffered']
    #allocation6 [shape = 's32[1]{0}', space=sflag, size = 0x4, scoped, tag = 'scoped memory for tpu_custom_call.1']
    #allocation7 [shape = 'u8[65536]{0}', space=vmem, size = 0x10000, scoped, tag = 'output window, operand 0, single buffered']
    %9 = vsyncpa [#allocation3], 0
    %10 = vsyncpa [#allocation6], 0
    %11 = vsyncpa [#allocation4], 0
    // Predicated region
    $region2: #{tpu_custom_call.1} parent=1 // pred_check
      _
    $region3: #{tpu_custom_call.1} parent=1 // pred_check_branch
      %13 = sbr.rel (0) target = $region5
    $region4: #{tpu_custom_call.1} parent=1 // pred_region
      %s15 = ssub.s32 2048, 2048
      %16 = vsyncadd [#allocation3], %s15
      %s17 = sshll.u32 [#allocation2], 4
      %s18 = int_to_ptr.vmem [resolvable:$true] %s17
      %23 = dma.hbm_to_vmem [thread:$0]  %s0, 2048, %s18, [#allocation3], 256, 256, 16
    $region5: #{tpu_custom_call.1} parent=1 // pred_fallthru
      _
    // Predicated region
    $region6: #{tpu_custom_call.1} parent=1 // pred_check
      _
    $region7: #{tpu_custom_call.1} parent=1 // pred_check_branch
      %25 = sbr.rel (0) target = $region9
    $region8: #{tpu_custom_call.1} parent=1 // pred_region
      %s27 = ssub.s32 2048, 2048
      %28 = vsyncadd [#allocation6], %s27
      %s29 = sshll.u32 [#allocation5], 4
      %s30 = int_to_ptr.vmem [resolvable:$true] %s29
      %35 = dma.hbm_to_vmem [thread:$0]  %s1, 2048, %s30, [#allocation6], 256, 256, 16
    $region9: #{tpu_custom_call.1} parent=1 // pred_fallthru
      _
    // Predicated region
    $region10: #{tpu_custom_call.1} parent=1 // pred_check
      _
    $region11: #{tpu_custom_call.1} parent=1 // pred_check_branch
      %37 = sbr.rel (0) target = $region13
    $region12: #{tpu_custom_call.1} parent=1 // pred_region
      _
    $region13: #{tpu_custom_call.1} parent=1 // pred_fallthru
      _
    // Predicated region
    $region14: #{tpu_custom_call.1} parent=1 // pred_check
      _
    $region15: #{tpu_custom_call.1} parent=1 // pred_check_branch
      %39 = sbr.rel (0) target = $region17
    $region16: #{tpu_custom_call.1} parent=1 // pred_region
      _
    $region17: #{tpu_custom_call.1} parent=1 // pred_fallthru
      _
    // Predicated region
    $region18: #{tpu_custom_call.1} parent=1 // pred_check
      _
    $region19: #{tpu_custom_call.1} parent=1 // pred_check_branch
      %41 = sbr.rel (0) target = $region21
    $region20: #{tpu_custom_call.1} parent=1 // pred_region
      %42 = dma.done [#allocation3], 2048
    $region21: #{tpu_custom_call.1} parent=1 // pred_fallthru
      _
    // Predicated region
    $region22: #{tpu_custom_call.1} parent=1 // pred_check
      _
    $region23: #{tpu_custom_call.1} parent=1 // pred_check_branch
      %44 = sbr.rel (0) target = $region25
    $region24: #{tpu_custom_call.1} parent=1 // pred_region
      %45 = dma.done [#allocation6], 2048
    $region25: #{tpu_custom_call.1} parent=1 // pred_fallthru
      _
    %v46 = vld [vmem:[#allocation2] sm:$0xff]
    %v47 = vld [vmem:[#allocation2 + $0x8] sm:$0xff]
    %v48 = vld [vmem:[#allocation2 + $0x10] sm:$0xff]
    %v49 = vld [vmem:[#allocation2 + $0x18] sm:$0xff]
    %v50 = vld [vmem:[#allocation2 + $0x20] sm:$0xff]
    %v51 = vld [vmem:[#allocation2 + $0x28] sm:$0xff]
    %v52 = vld [vmem:[#allocation2 + $0x30] sm:$0xff]
    %v53 = vld [vmem:[#allocation2 + $0x38] sm:$0xff]
    %v54 = vld [vmem:[#allocation2 + $0x40] sm:$0xff]
    %v55 = vld [vmem:[#allocation2 + $0x48] sm:$0xff]
    %v56 = vld [vmem:[#allocation2 + $0x50] sm:$0xff]
    %v57 = vld [vmem:[#allocation2 + $0x58] sm:$0xff]
    %v58 = vld [vmem:[#allocation2 + $0x60] sm:$0xff]
    %v59 = vld [vmem:[#allocation2 + $0x68] sm:$0xff]
    %v60 = vld [vmem:[#allocation2 + $0x70] sm:$0xff]
    %v61 = vld [vmem:[#allocation2 + $0x78] sm:$0xff]
    %v62 = vadd.f32 %v46, %v47
    %63 = vadd.xlane.f32.xlu0 %v62
    %v64 = vpop.xlane.xlu0 %63
    %v65 = vadd.f32 %v48, %v49
    %66 = vadd.xlane.f32.xlu0 %v65
    %v67 = vpop.xlane.xlu0 %66
    %v68 = vadd.f32 %v50, %v51
    %69 = vadd.xlane.f32.xlu0 %v68
    %v70 = vpop.xlane.xlu0 %69
    %v71 = vadd.f32 %v52, %v53
    %72 = vadd.xlane.f32.xlu0 %v71
    %v73 = vpop.xlane.xlu0 %72
    %v74 = vadd.f32 %v54, %v55
    %75 = vadd.xlane.f32.xlu0 %v74
    %v76 = vpop.xlane.xlu0 %75
    %v77 = vadd.f32 %v56, %v57
    %78 = vadd.xlane.f32.xlu0 %v77
    %v79 = vpop.xlane.xlu0 %78
    %v80 = vadd.f32 %v58, %v59
    %81 = vadd.xlane.f32.xlu0 %v80
    %v82 = vpop.xlane.xlu0 %81
    %v83 = vadd.f32 %v60, %v61
    %84 = vadd.xlane.f32.xlu0 %v83
    %v85 = vpop.xlane.xlu0 %84
    %v86 = vld [vmem:[#allocation5] sm:$0xff]
    %v87 = vld [vmem:[#allocation5 + $0x8] sm:$0xff]
    %v88 = vld [vmem:[#allocation5 + $0x10] sm:$0xff]
    %v89 = vld [vmem:[#allocation5 + $0x18] sm:$0xff]
    %v90 = vld [vmem:[#allocation5 + $0x20] sm:$0xff]
    %v91 = vld [vmem:[#allocation5 + $0x28] sm:$0xff]
    %v92 = vld [vmem:[#allocation5 + $0x30] sm:$0xff]
    %v93 = vld [vmem:[#allocation5 + $0x38] sm:$0xff]
    %v94 = vld [vmem:[#allocation5 + $0x40] sm:$0xff]
    %v95 = vld [vmem:[#allocation5 + $0x48] sm:$0xff]
    %v96 = vld [vmem:[#allocation5 + $0x50] sm:$0xff]
    %v97 = vld [vmem:[#allocation5 + $0x58] sm:$0xff]
    %v98 = vld [vmem:[#allocation5 + $0x60] sm:$0xff]
    %v99 = vld [vmem:[#allocation5 + $0x68] sm:$0xff]
    %v100 = vld [vmem:[#allocation5 + $0x70] sm:$0xff]
    %v101 = vld [vmem:[#allocation5 + $0x78] sm:$0xff]
    %v102 = vadd.f32 %v86, %v87
    %103 = vadd.xlane.f32.xlu0 %v102
    %v104 = vpop.xlane.xlu0 %103
    %v105 = vadd.f32 %v88, %v89
    %106 = vadd.xlane.f32.xlu0 %v105
    %v107 = vpop.xlane.xlu0 %106
    %v108 = vadd.f32 %v90, %v91
    %109 = vadd.xlane.f32.xlu0 %v108
    %v110 = vpop.xlane.xlu0 %109
    %v111 = vadd.f32 %v92, %v93
    %112 = vadd.xlane.f32.xlu0 %v111
    %v113 = vpop.xlane.xlu0 %112
    %v114 = vadd.f32 %v94, %v95
    %115 = vadd.xlane.f32.xlu0 %v114
    %v116 = vpop.xlane.xlu0 %115
    %v117 = vadd.f32 %v96, %v97
    %118 = vadd.xlane.f32.xlu0 %v117
    %v119 = vpop.xlane.xlu0 %118
    %v120 = vadd.f32 %v98, %v99
    %121 = vadd.xlane.f32.xlu0 %v120
    %v122 = vpop.xlane.xlu0 %121
    %v123 = vadd.f32 %v100, %v101
    %124 = vadd.xlane.f32.xlu0 %v123
    %v125 = vpop.xlane.xlu0 %124
    %v126 = vadd.f32 %v64, %v104
    %v127 = vadd.f32 %v67, %v107
    %v128 = vadd.f32 %v70, %v110
    %v129 = vadd.f32 %v73, %v113
    %v130 = vadd.f32 %v76, %v116
    %v131 = vadd.f32 %v79, %v119
    %v132 = vadd.f32 %v82, %v122
    %v133 = vadd.f32 %v85, %v125
    %v134 = vmul.f32 %v126, 0.00390625
    %v135 = vmul.f32 %v127, 0.00390625
    %v136 = vmul.f32 %v128, 0.00390625
    %v137 = vmul.f32 %v129, 0.00390625
    %v138 = vmul.f32 %v130, 0.00390625
    %v139 = vmul.f32 %v131, 0.00390625
    %v140 = vmul.f32 %v132, 0.00390625
    %v141 = vmul.f32 %v133, 0.00390625
    %v142 = vld [vmem:[%s2] sm:$0xff]
    %v143 = vld [vmem:[%s2 + $0x8] sm:$0xff]
    %v144 = vld [vmem:[%s2 + $0x10] sm:$0xff]
    %v145 = vld [vmem:[%s2 + $0x18] sm:$0xff]
    %v146 = vmul.f32 %v142, %v134
    %v147 = vmul.f32 %v143, %v135
    %v148 = vmul.f32 %v144, %v136
    %v149 = vmul.f32 %v145, %v137
    %v150 = vmul.f32 %v142, %v138
    %v151 = vmul.f32 %v143, %v139
    %v152 = vmul.f32 %v144, %v140
    %v153 = vmul.f32 %v145, %v141
    %vm154 = vcmask 31744
    %v155 = vsel %vm154, %v146, 0.0
    %v156 = vsel %vm154, %v147, 0.0
    %v157 = vadd.f32 %v155, %v156
    %v158 = vsel %vm154, %v148, 0.0
    %v159 = vadd.f32 %v157, %v158
    %v160 = vsel %vm154, %v149, 0.0
    %v161 = vadd.f32 %v159, %v160
    %v162 = vrot.slane %v161, 4
    %v163 = vadd.f32 %v161, %v162
    %v164 = vrot.slane %v163, 2
    %v165 = vadd.f32 %v163, %v164
    %v166 = vrot.slane %v165, 1
    %v167 = vadd.f32 %v165, %v166
    %v168 = vsel %vm154, %v150, 0.0
    %v169 = vsel %vm154, %v151, 0.0
    %v170 = vadd.f32 %v168, %v169
    %v171 = vsel %vm154, %v152, 0.0
    %v172 = vadd.f32 %v170, %v171
    %v173 = vsel %vm154, %v153, 0.0
    %v174 = vadd.f32 %v172, %v173
    %v175 = vrot.slane %v174, 4
    %v176 = vadd.f32 %v174, %v175
    %v177 = vrot.slane %v176, 2
    %v178 = vadd.f32 %v176, %v177
    %v179 = vrot.slane %v178, 1
    %v180 = vadd.f32 %v178, %v179
    %v181 = vmax.f32 %v167, 0.0
    %v182 = vmax.f32 %v180, 0.0
    %v183 = vld [vmem:[%s3] sm:$0xff]
    %v184 = vld [vmem:[%s3 + $0x8] sm:$0xff]
    %v185 = vld [vmem:[%s3 + $0x10] sm:$0xff]
    %v186 = vld [vmem:[%s3 + $0x18] sm:$0xff]
    %v187 = vmul.f32 %v183, %v181
    %v188 = vmul.f32 %v184, %v181
    %v189 = vmul.f32 %v185, %v181
    %v190 = vmul.f32 %v186, %v181
    %v191 = vmul.f32 %v183, %v182
    %v192 = vmul.f32 %v184, %v182
    %v193 = vmul.f32 %v185, %v182
    %v194 = vmul.f32 %v186, %v182
    %v195 = vsel %vm154, %v187, 0.0
    %196 = vadd.xlane.f32.xlu0 %v195
    %v197 = vpop.xlane.xlu0 %196
    %v198 = vsel %vm154, %v188, 0.0
    %199 = vadd.xlane.f32.xlu0 %v198
    %v200 = vpop.xlane.xlu0 %199
    %v201 = vsel %vm154, %v189, 0.0
    %202 = vadd.xlane.f32.xlu0 %v201
    %v203 = vpop.xlane.xlu0 %202
    %v204 = vsel %vm154, %v190, 0.0
    %205 = vadd.xlane.f32.xlu0 %v204
    %v206 = vpop.xlane.xlu0 %205
    %v207 = vsel %vm154, %v191, 0.0
    %208 = vadd.xlane.f32.xlu0 %v207
    %v209 = vpop.xlane.xlu0 %208
    %v210 = vsel %vm154, %v192, 0.0
    %211 = vadd.xlane.f32.xlu0 %v210
    %v212 = vpop.xlane.xlu0 %211
    %v213 = vsel %vm154, %v193, 0.0
    %214 = vadd.xlane.f32.xlu0 %v213
    %v215 = vpop.xlane.xlu0 %214
    %v216 = vsel %vm154, %v194, 0.0
    %217 = vadd.xlane.f32.xlu0 %v216
    %v218 = vpop.xlane.xlu0 %217
    %s219 = scalar_lea.vmem %s3, 32
    %v220 = vld [vmem:[%s219] sm:$0xff]
    %v221 = vld [vmem:[%s219 + $0x8] sm:$0xff]
    %v222 = vld [vmem:[%s219 + $0x10] sm:$0xff]
    %v223 = vld [vmem:[%s219 + $0x18] sm:$0xff]
    %v224 = vmul.f32 %v220, %v181
    %v225 = vmul.f32 %v221, %v181
    %v226 = vmul.f32 %v222, %v181
    %v227 = vmul.f32 %v223, %v181
    %v228 = vmul.f32 %v220, %v182
    %v229 = vmul.f32 %v221, %v182
    %v230 = vmul.f32 %v222, %v182
    %v231 = vmul.f32 %v223, %v182
    %v232 = vsel %vm154, %v224, 0.0
    %233 = vadd.xlane.f32.xlu0 %v232
    %v234 = vpop.xlane.xlu0 %233
    %v235 = vsel %vm154, %v225, 0.0
    %236 = vadd.xlane.f32.xlu0 %v235
    %v237 = vpop.xlane.xlu0 %236
    %v238 = vsel %vm154, %v226, 0.0
    %239 = vadd.xlane.f32.xlu0 %v238
    %v240 = vpop.xlane.xlu0 %239
    %v241 = vsel %vm154, %v227, 0.0
    %242 = vadd.xlane.f32.xlu0 %v241
    %v243 = vpop.xlane.xlu0 %242
    %v244 = vsel %vm154, %v228, 0.0
    %245 = vadd.xlane.f32.xlu0 %v244
    %v246 = vpop.xlane.xlu0 %245
    %v247 = vsel %vm154, %v229, 0.0
    %248 = vadd.xlane.f32.xlu0 %v247
    %v249 = vpop.xlane.xlu0 %248
    %v250 = vsel %vm154, %v230, 0.0
    %251 = vadd.xlane.f32.xlu0 %v250
    %v252 = vpop.xlane.xlu0 %251
    %v253 = vsel %vm154, %v231, 0.0
    %254 = vadd.xlane.f32.xlu0 %v253
    %v255 = vpop.xlane.xlu0 %254
    %v256 = vmax.f32 %v197, %v234
    %v257 = vmax.f32 %v200, %v237
    %v258 = vmax.f32 %v203, %v240
    %v259 = vmax.f32 %v206, %v243
    %v260 = vmax.f32 %v209, %v246
    %v261 = vmax.f32 %v212, %v249
    %v262 = vmax.f32 %v215, %v252
    %v263 = vmax.f32 %v218, %v255
    %v264 = vsub.f32 %v197, %v256
    %v265 = vsub.f32 %v200, %v257
    %v266 = vsub.f32 %v203, %v258
    %v267 = vsub.f32 %v206, %v259
    %v268 = vsub.f32 %v209, %v260
    %v269 = vsub.f32 %v212, %v261
    %v270 = vsub.f32 %v215, %v262
    %v271 = vsub.f32 %v218, %v263
    %v272 = vmul.f32 %v264, 1.442695
    %v273 = vpow.pop %v272
    %v274 = vmul.f32 %v265, 1.442695
    %v275 = vpow.pop %v274
    %v276 = vmul.f32 %v266, 1.442695
    %v277 = vpow.pop %v276
    %v278 = vmul.f32 %v267, 1.442695
    %v279 = vpow.pop %v278
    %v280 = vmul.f32 %v268, 1.442695
    %v281 = vpow.pop %v280
    %v282 = vmul.f32 %v269, 1.442695
    %v283 = vpow.pop %v282
    %v284 = vmul.f32 %v270, 1.442695
    %v285 = vpow.pop %v284
    %v286 = vmul.f32 %v271, 1.442695
    %v287 = vpow.pop %v286
    %v288 = vsub.f32 %v234, %v256
    %v289 = vsub.f32 %v237, %v257
    %v290 = vsub.f32 %v240, %v258
    %v291 = vsub.f32 %v243, %v259
    %v292 = vsub.f32 %v246, %v260
    %v293 = vsub.f32 %v249, %v261
    %v294 = vsub.f32 %v252, %v262
    %v295 = vsub.f32 %v255, %v263
    %v296 = vmul.f32 %v288, 1.442695
    %v297 = vpow.pop %v296
    %v298 = vmul.f32 %v289, 1.442695
    %v299 = vpow.pop %v298
    %v300 = vmul.f32 %v290, 1.442695
    %v301 = vpow.pop %v300
    %v302 = vmul.f32 %v291, 1.442695
    %v303 = vpow.pop %v302
    %v304 = vmul.f32 %v292, 1.442695
    %v305 = vpow.pop %v304
    %v306 = vmul.f32 %v293, 1.442695
    %v307 = vpow.pop %v306
    %v308 = vmul.f32 %v294, 1.442695
    %v309 = vpow.pop %v308
    %v310 = vmul.f32 %v295, 1.442695
    %v311 = vpow.pop %v310
    %v312 = vadd.f32 %v273, %v297
    %v313 = vadd.f32 %v275, %v299
    %v314 = vadd.f32 %v277, %v301
    %v315 = vadd.f32 %v279, %v303
    %v316 = vadd.f32 %v281, %v305
    %v317 = vadd.f32 %v283, %v307
    %v318 = vadd.f32 %v285, %v309
    %v319 = vadd.f32 %v287, %v311
    %v320 = vrcp.pop %v312
    %v321 = vrcp.pop %v313
    %v322 = vrcp.pop %v314
    %v323 = vrcp.pop %v315
    %v324 = vrcp.pop %v316
    %v325 = vrcp.pop %v317
    %v326 = vrcp.pop %v318
    %v327 = vrcp.pop %v319
    %v328 = vmul.f32 %v273, %v320
    %v329 = vmul.f32 %v275, %v321
    %v330 = vmul.f32 %v277, %v322
    %v331 = vmul.f32 %v279, %v323
    %v332 = vmul.f32 %v281, %v324
    %v333 = vmul.f32 %v283, %v325
    %v334 = vmul.f32 %v285, %v326
    %v335 = vmul.f32 %v287, %v327
    %v336 = vmul.f32 %v46, %v328
    %v337 = vmul.f32 %v47, %v328
    %v338 = vmul.f32 %v48, %v329
    %v339 = vmul.f32 %v49, %v329
    %v340 = vmul.f32 %v50, %v330
    %v341 = vmul.f32 %v51, %v330
    %v342 = vmul.f32 %v52, %v331
    %v343 = vmul.f32 %v53, %v331
    %v344 = vmul.f32 %v54, %v332
    %v345 = vmul.f32 %v55, %v332
    %v346 = vmul.f32 %v56, %v333
    %v347 = vmul.f32 %v57, %v333
    %v348 = vmul.f32 %v58, %v334
    %v349 = vmul.f32 %v59, %v334
    %v350 = vmul.f32 %v60, %v335
    %v351 = vmul.f32 %v61, %v335
    %v352 = vmul.f32 %v297, %v320
    %v353 = vmul.f32 %v299, %v321
    %v354 = vmul.f32 %v301, %v322
    %v355 = vmul.f32 %v303, %v323
    %v356 = vmul.f32 %v305, %v324
    %v357 = vmul.f32 %v307, %v325
    %v358 = vmul.f32 %v309, %v326
    %v359 = vmul.f32 %v311, %v327
    %v360 = vmul.f32 %v86, %v352
    %v361 = vmul.f32 %v87, %v352
    %v362 = vmul.f32 %v88, %v353
    %v363 = vmul.f32 %v89, %v353
    %v364 = vmul.f32 %v90, %v354
    %v365 = vmul.f32 %v91, %v354
    %v366 = vmul.f32 %v92, %v355
    %v367 = vmul.f32 %v93, %v355
    %v368 = vmul.f32 %v94, %v356
    %v369 = vmul.f32 %v95, %v356
    %v370 = vmul.f32 %v96, %v357
    %v371 = vmul.f32 %v97, %v357
    %v372 = vmul.f32 %v98, %v358
    %v373 = vmul.f32 %v99, %v358
    %v374 = vmul.f32 %v100, %v359
    %v375 = vmul.f32 %v101, %v359
    %v376 = vadd.f32 %v336, %v360
    %v377 = vadd.f32 %v337, %v361
    %v378 = vadd.f32 %v338, %v362
    %v379 = vadd.f32 %v339, %v363
    %v380 = vadd.f32 %v340, %v364
    %v381 = vadd.f32 %v341, %v365
    %v382 = vadd.f32 %v342, %v366
    %v383 = vadd.f32 %v343, %v367
    %v384 = vadd.f32 %v344, %v368
    %v385 = vadd.f32 %v345, %v369
    %v386 = vadd.f32 %v346, %v370
    %v387 = vadd.f32 %v347, %v371
    %v388 = vadd.f32 %v348, %v372
    %v389 = vadd.f32 %v349, %v373
    %v390 = vadd.f32 %v350, %v374
    %v391 = vadd.f32 %v351, %v375
    %392 = vst [vmem:[#allocation7] sm:$0xff] %v376
    %393 = vst [vmem:[#allocation7 + $0x8] sm:$0xff] %v377
    %394 = vst [vmem:[#allocation7 + $0x10] sm:$0xff] %v378
    %395 = vst [vmem:[#allocation7 + $0x18] sm:$0xff] %v379
    %396 = vst [vmem:[#allocation7 + $0x20] sm:$0xff] %v380
    %397 = vst [vmem:[#allocation7 + $0x28] sm:$0xff] %v381
    %398 = vst [vmem:[#allocation7 + $0x30] sm:$0xff] %v382
    %399 = vst [vmem:[#allocation7 + $0x38] sm:$0xff] %v383
    %400 = vst [vmem:[#allocation7 + $0x40] sm:$0xff] %v384
    %401 = vst [vmem:[#allocation7 + $0x48] sm:$0xff] %v385
    %402 = vst [vmem:[#allocation7 + $0x50] sm:$0xff] %v386
    %403 = vst [vmem:[#allocation7 + $0x58] sm:$0xff] %v387
    %404 = vst [vmem:[#allocation7 + $0x60] sm:$0xff] %v388
    %405 = vst [vmem:[#allocation7 + $0x68] sm:$0xff] %v389
    %406 = vst [vmem:[#allocation7 + $0x70] sm:$0xff] %v390
    %407 = vst [vmem:[#allocation7 + $0x78] sm:$0xff] %v391
    // Predicated region
    $region26: #{tpu_custom_call.1} parent=1 // pred_check
      _
    $region27: #{tpu_custom_call.1} parent=1 // pred_check_branch
      %409 = sbr.rel (0) target = $region29
    $region28: #{tpu_custom_call.1} parent=1 // pred_region
      %s411 = ssub.s32 2048, 2048
      %412 = vsyncadd [#allocation4], %s411
      %s413 = sshll.u32 [#allocation7], 4
      %s414 = int_to_ptr.vmem [resolvable:$true] %s413
      %419 = dma.vmem_to_hbm [thread:$0]  %s414, 2048, %s4, [#allocation4], 256, 256, 16
    $region29: #{tpu_custom_call.1} parent=1 // pred_fallthru
      _
    // Predicated region
    $region30: #{tpu_custom_call.1} parent=1 // pred_check
      _
    $region31: #{tpu_custom_call.1} parent=1 // pred_check_branch
      %421 = sbr.rel (0) target = $region33
    $region32: #{tpu_custom_call.1} parent=1 // pred_region
      %422 = dma.done [#allocation4], 2048
    $region33: #{tpu_custom_call.1} parent=1 // pred_fallthru
      _
    %423 = vsyncpa [#allocation3], 1
    %424 = vsyncpa [#allocation6], 1
    %425 = vsyncpa [#allocation4], 1

</llo_original>
